<compile_context>
chip_gen: v5e
topology: v5e:2x2
jax: 0.10.0
libtpu: 0.0.40
codegen_flags: <defaults>
</compile_context>

<pallas_src>
import jax
import jax.numpy as jnp
from jax.experimental import pallas as pl
from jax.experimental.pallas import tpu as pltpu

_LANES = 128
_SUBLANES = 8


def _linear_sigmoid_kernel(w_ref, b_ref, x_ref, o_ref):
    # w_ref/b_ref: (1,) f32 scalars in SMEM holding 0.5*w and 0.5*b (scalar
    # prefetch -> no tiny VMEM DMAs). x_ref/o_ref: (block_rows, 128) f32 tiles.
    w_half = w_ref[0]
    b_half = b_ref[0]
    t = x_ref[...] * w_half + b_half  # VPU FMA; 0.5 scale folded into scalars
    # Exact sigmoid via a single EUP op: sigmoid(z) = 0.5*tanh(z/2) + 0.5.
    o_ref[...] = (jnp.tanh(t) * 0.5 + 0.5).astype(o_ref.dtype)


def linear_sigmoid(x, w, b, *, max_block_rows=4096, min_pallas_elems=0):
    """x: (N, 1) f32, w: (1, 1) f32, b: (1,) f32 -> (N, 1) = sigmoid(x @ W^T + b)."""
    n = x.shape[0]

    # Optional tiny-batch fast path (fused XLA elementwise beats kernel launch
    # overhead for very small N). Disabled by default so the Pallas kernel is
    # always exercised; callers can pass e.g. min_pallas_elems=1 << 16.
    if n < min_pallas_elems:
        return jax.nn.sigmoid(x * w.reshape(()) + b.reshape(())).astype(x.dtype)

    # Lane-dense slab view: (N, 1) -> (rows, 128). Padding is only needed when
    # N is not a multiple of 128, and is at most 127 elements (not a full
    # block-multiple pad), so the extra HBM traffic is negligible.
    rows = -(-n // _LANES)
    n_pad = rows * _LANES

    x_flat = x.reshape(-1).astype(jnp.float32)
    if n_pad != n:
        x_flat = jnp.pad(x_flat, (0, n_pad - n))
    x_slab = x_flat.reshape(rows, _LANES)

    # Block size: as large as possible (MiB-class tiles amortize the ~0.35 us
    # per-step overhead) while staying a multiple of 8 when it is a partial
    # cover of the rows axis. 4096x128 f32 = 2 MiB/buffer; double-buffered
    # in+out = 8 MiB, which fits the default scoped VMEM on v5e/v6e/v7x.
    if rows <= max_block_rows:
        block_rows = rows  # single full-extent block; any row count is legal
    else:
        block_rows = max(_SUBLANES, (max_block_rows // _SUBLANES) * _SUBLANES)
    grid = -(-rows // block_rows)  # partial trailing block is masked by Pallas

    # Prescale w, b by 0.5 for the tanh-based sigmoid (saves a VALU op/vreg).
    w_half = (0.5 * w.reshape(1)).astype(jnp.float32)
    b_half = (0.5 * b.reshape(1)).astype(jnp.float32)

    out_slab = pl.pallas_call(
        _linear_sigmoid_kernel,
        out_shape=jax.ShapeDtypeStruct((rows, _LANES), jnp.float32),
        grid_spec=pltpu.PrefetchScalarGridSpec(
            num_scalar_prefetch=2,  # w_half, b_half land in SMEM
            grid=(grid,),
            in_specs=[
                pl.BlockSpec((block_rows, _LANES), lambda i, w_r, b_r: (i, 0)),
            ],
            out_specs=pl.BlockSpec((block_rows, _LANES), lambda i, w_r, b_r: (i, 0)),
        ),
        compiler_params=pltpu.CompilerParams(
            # Rows are independent -> megacore sharding + pipelined DMA overlap.
            dimension_semantics=("parallel",),
        ),
    )(w_half, b_half, x_slab)

    out_flat = out_slab.reshape(-1)
    if n_pad != n:
        out_flat = out_flat[:n]  # drop the <=127 pad elements
    return out_flat.reshape(n, 1).astype(x.dtype)


if __name__ == "__main__":
    key = jax.random.PRNGKey(0)
    kx, kw, kb, kx2 = jax.random.split(key, 4)

    # Deterministic parameters (PyTorch default for fan_in=1: U(-1, 1)).
    w = jax.random.uniform(kw, (1, 1), dtype=jnp.float32, minval=-1.0, maxval=1.0)
    b = jax.random.uniform(kb, (1,), dtype=jnp.float32, minval=-1.0, maxval=1.0)

    # Case 1: small batch consistent with nn.Linear(1, 1): N=8, feature=1.
    x_small = jax.random.normal(kx, (8, 1), dtype=jnp.float32)
    y_small = jax.block_until_ready(linear_sigmoid(x_small, w, b))
    ref_small = jax.nn.sigmoid(x_small @ w.T + b)
    assert y_small.shape == ref_small.shape, (y_small.shape, ref_small.shape)
    assert jnp.allclose(y_small, ref_small, atol=1e-5), (y_small, ref_small)

    # Case 2: multi-step grid with a partial trailing block (rows=10, block=8)
    # and no input padding (N % 128 == 0) — exercises Pallas block masking.
    x_big = jax.random.normal(kx2, (1280, 1), dtype=jnp.float32)
    y_big = jax.block_until_ready(linear_sigmoid(x_big, w, b, max_block_rows=8))
    ref_big = jax.nn.sigmoid(x_big @ w.T + b)
    assert y_big.shape == ref_big.shape, (y_big.shape, ref_big.shape)
    assert jnp.allclose(y_big, ref_big, atol=1e-5)

    print("KERNEL_OK")
</pallas_src>

<mosaic_0001>
module attributes {stable_mosaic.version = 11 : i64} {
  func.func @_linear_sigmoid_kernel(%arg0: i32, %arg1: memref<1xf32, #tpu.memory_space<smem>>, %arg2: memref<1xf32, #tpu.memory_space<smem>>, %arg3: memref<1x128xf32, #tpu.memory_space<vmem>>, %arg4: memref<1x128xf32, #tpu.memory_space<vmem>>) attributes {dimension_semantics = [#tpu.dimension_semantics<parallel>], iteration_bounds = array<i64: 1>, scalar_prefetch = 2 : i64, scratch_operands = 0 : i64, tpu.core_type = #tpu.core_type<tc>, window_params = [{transform_indices = @transform_0, window_bounds = array<i64: 1, 128>}, {transform_indices = @transform_1, window_bounds = array<i64: 1, 128>}]} {
    %c0 = arith.constant 0 : index
    %0 = memref.load %arg1[%c0] : memref<1xf32, #tpu.memory_space<smem>>
    %c0_0 = arith.constant 0 : index
    %1 = memref.load %arg2[%c0_0] : memref<1xf32, #tpu.memory_space<smem>>
    %c0_1 = arith.constant 0 : index
    %c0_2 = arith.constant 0 : index
    %2 = vector.load %arg3[%c0_1, %c0_2] : memref<1x128xf32, #tpu.memory_space<vmem>>, vector<1x128xf32>
    %3 = vector.broadcast %0 : f32 to vector<1x128xf32>
    %4 = arith.mulf %2, %3 : vector<1x128xf32>
    %5 = vector.broadcast %1 : f32 to vector<1x128xf32>
    %6 = arith.addf %4, %5 : vector<1x128xf32>
    %7 = math.tanh %6 : vector<1x128xf32>
    %cst = arith.constant 5.000000e-01 : f32
    %8 = vector.broadcast %cst : f32 to vector<1x128xf32>
    %9 = arith.mulf %7, %8 : vector<1x128xf32>
    %cst_3 = arith.constant 5.000000e-01 : f32
    %10 = vector.broadcast %cst_3 : f32 to vector<1x128xf32>
    %11 = arith.addf %9, %10 : vector<1x128xf32>
    %c0_4 = arith.constant 0 : index
    %c0_5 = arith.constant 0 : index
    %12 = vector.load %arg4[%c0_4, %c0_5] : memref<1x128xf32, #tpu.memory_space<vmem>>, vector<1x128xf32>
    tpu.vector_store %arg4[%c0_4, %c0_5], %11 {strides = array<i32>} : memref<1x128xf32, #tpu.memory_space<vmem>>, vector<1x128xf32>,
    return
  }
  func.func @transform_0(%arg0: i32, %arg1: memref<1xf32, #tpu.memory_space<smem>>, %arg2: memref<1xf32, #tpu.memory_space<smem>>) -> (i32, i32) {
    %c0_i32 = arith.constant 0 : i32
    %c0_i32_0 = arith.constant 0 : i32
    return %arg0, %c0_i32 : i32, i32
  }
  func.func @transform_1(%arg0: i32, %arg1: memref<1xf32, #tpu.memory_space<smem>>, %arg2: memref<1xf32, #tpu.memory_space<smem>>) -> (i32, i32) {
    %c0_i32 = arith.constant 0 : i32
    %c0_i32_0 = arith.constant 0 : i32
    return %arg0, %c0_i32 : i32, i32
  }
}

</mosaic_0001>

<llo_original>
// kernel: tpu_custom_call.1
$region0: #{tpu_custom_call.1}
  #allocation0 [shape = 'u32[]', space=smem, size = 0x4, offset = 0x4, fixed_abs, tag = 'smem constant byte address 0x4 - core index']
  #allocation1 [shape = 'u32[72,128]{1,0:T(1,128)}', space=vmem, size = 0x9000, scoped, tag = 'internal scratch']
  #allocation2 [shape = 's32[1]{0}', space=sflag, size = 0x4, scoped, tag = 'scoped memory for tpu_custom_call.1']
  #allocation3 [shape = 'f32[1]{0:T(128)S(6)}', space=smem, size = 0x200, scoped, tag = 'prefetched SMEM operand 0']
  #allocation4 [shape = 'f32[1]{0:T(128)S(6)}', space=smem, size = 0x200, scoped, tag = 'prefetched SMEM operand 1']
  %s0 = inlined_call_operand.<no memory space> [shape: f32[1], index: 0, kind: input, shape index: {}]
  %s1 = inlined_call_operand.<no memory space> [shape: f32[1], index: 1, kind: input, shape index: {}]
  %s2 = inlined_call_operand.vmem [shape: f32[1,128], index: 2, kind: input, shape index: {}]
  %s3 = inlined_call_operand.hbm [shape: f32[1,128], index: 3, kind: output, shape index: {}]
  %s4 = sld [smem:[#allocation0]]
  $region14: #{tpu_custom_call.1} parent=0
    _
  %s6 = ssub.s32 1, %s4
  %s7 = scalar_select 0, %s6, %s4
  %8 = sst [smem:[#allocation3]] %s0
  %9 = sst [smem:[#allocation4]] %s1
  $region1: #{tpu_custom_call.1} parent=0
    #allocation5 [shape = 'u8[512]{0}', space=vmem, size = 0x400, scoped, tag = 'output window, operand 0, single buffered']
    #allocation6 [shape = 's32[1]{0}', space=sflag, size = 0x4, scoped, tag = 'scoped memory for tpu_custom_call.1']
    %10 = vsyncpa [#allocation6], 0
    // Predicated region
    $region2: #{tpu_custom_call.1} parent=1 // pred_check
      _
    $region3: #{tpu_custom_call.1} parent=1 // pred_check_branch
      %12 = sbr.rel (0) target = $region5
    $region4: #{tpu_custom_call.1} parent=1 // pred_region
      _
    $region5: #{tpu_custom_call.1} parent=1 // pred_fallthru
      _
    %s13 = sld [smem:[#allocation3]]
    %s14 = sld [smem:[#allocation4]]
    %v15 = vld [vmem:[%s2] sm:$0x1]
    %v16 = vstv %s13
    %v17 = vmul.f32 %v15, %v16
    %v18 = vstv %s14
    %v19 = vadd.f32 %v17, %v18
    %v20 = vtanh.pop %v19
    %v21 = vmul.f32 %v20, 0.5
    %v22 = vadd.f32 %v21, 0.5
    %23 = vst [vmem:[#allocation5] sm:$0x1] %v22
    // Predicated region
    $region6: #{tpu_custom_call.1} parent=1 // pred_check
      _
    $region7: #{tpu_custom_call.1} parent=1 // pred_check_branch
      %25 = sbr.rel (0) target = $region9
    $region8: #{tpu_custom_call.1} parent=1 // pred_region
      %27 = vsyncadd [#allocation6], 0
      %s29 = sshll.u32 [#allocation5], 4
      %s30 = int_to_ptr.vmem [resolvable:$true] %s29
      %s31 = sshll.u32 %s3, 4
      %s32 = int_to_ptr.hbm [resolvable:$true] %s31
      %34 = dma.vmem_to_hbm [thread:$0]  %s30, 16, %s32, [#allocation6]
    $region9: #{tpu_custom_call.1} parent=1 // pred_fallthru
      _
    // Predicated region
    $region10: #{tpu_custom_call.1} parent=1 // pred_check
      _
    $region11: #{tpu_custom_call.1} parent=1 // pred_check_branch
      %36 = sbr.rel (0) target = $region13
    $region12: #{tpu_custom_call.1} parent=1 // pred_region
      %38 = dma.done [#allocation6], 16
    $region13: #{tpu_custom_call.1} parent=1 // pred_fallthru
      _
    %39 = vsyncpa [#allocation6], 1

</llo_original>
